<compile_context>
chip_gen: v7x
topology: tpu7x:2x2x1
jax: 0.10.0
libtpu: 0.0.40
codegen_flags: <defaults>
</compile_context>

<pallas_src>
import functools

import jax
import jax.numpy as jnp
from jax.experimental import pallas as pl
from jax.experimental.pallas import tpu as pltpu


# ----------------------------- Pallas kernel --------------------------------
def _rcnn_head_kernel(feat_ref, w1_ref, b1_ref, w2_ref, b2_ref, out_ref, *,
                      n_cls):
    """Fused head: FC+ReLU, fused cls|bbox linear, masked softmax on cls lanes.

    feat_ref : (tm, Din)  bf16   pooled ROI feature tile
    w1/b1    : (Din, H) bf16, (1, H) f32      _head_to_tail FC
    w2/b2    : (H, P) bf16, (1, P) f32        [cls | bbox | zero-pad] fused,
                                              P a multiple of 128 (lane-dense)
    out      : (tm, P) f32   lanes [0,n_cls) = cls_prob, next 4*n_cls = bbox
    """
    x = feat_ref[...]

    # _head_to_tail: single FC + ReLU (f32 accumulation, f32 VPU ReLU)
    h = jnp.dot(x, w1_ref[...], preferred_element_type=jnp.float32) + b1_ref[...]
    h = jnp.maximum(h, 0.0)

    # Fused RCNN_cls_score | RCNN_bbox_pred: one lane-dense MXU matmul.
    fused = (jnp.dot(h.astype(w2_ref.dtype), w2_ref[...],
                     preferred_element_type=jnp.float32) + b2_ref[...])

    # F.softmax over the class lanes only (bbox / padded lanes masked out).
    lane = jax.lax.broadcasted_iota(jnp.int32, fused.shape, 1)
    is_cls = lane < n_cls
    logits = jnp.where(is_cls, fused, -jnp.inf)
    m = jnp.max(logits, axis=-1, keepdims=True)
    e = jnp.where(is_cls, jnp.exp(logits - m), 0.0)
    denom = jnp.sum(e, axis=-1, keepdims=True)
    prob = e * pl.reciprocal(denom, approx=True)     # EUP slot -> ~free

    # cls lanes carry probabilities, remaining lanes carry raw bbox_pred
    # (padded lanes hold don't-care values and are sliced off in the wrapper).
    out_ref[...] = jnp.where(is_cls, prob, fused)


def rcnn_head_pallas(feat, w1, b1, wc, bc, wb, bb, *, tm=128):
    """Head wrapper: fuse/pad weights, tile over N, slice outputs lane-dense."""
    n, din = feat.shape
    hdim = w1.shape[1]
    n_cls = wc.shape[1]
    n_bbox = wb.shape[1]
    p = pl.cdiv(n_cls + n_bbox, 128) * 128            # lane-dense output width

    # Fuse cls|bbox weights/biases into one padded (H, P) / (1, P) slab.
    w2 = (jnp.zeros((hdim, p), jnp.float32)
          .at[:, :n_cls].set(wc)
          .at[:, n_cls:n_cls + n_bbox].set(wb))
    b2 = (jnp.zeros((1, p), jnp.float32)
          .at[:, :n_cls].set(bc)
          .at[:, n_cls:n_cls + n_bbox].set(bb))

    # Row-pad feat to a multiple of the row tile.
    n_pad = pl.cdiv(n, tm) * tm
    if n_pad != n:
        feat = jnp.zeros((n_pad, din), feat.dtype).at[:n, :].set(feat)

    # bf16 MXU operands; f32 accumulation inside the kernel.
    feat_b = feat.astype(jnp.bfloat16)
    w1_b = w1.astype(jnp.bfloat16)
    w2_b = w2.astype(jnp.bfloat16)

    kernel = functools.partial(_rcnn_head_kernel, n_cls=n_cls)

    out = pl.pallas_call(
        kernel,
        out_shape=jax.ShapeDtypeStruct((n_pad, p), jnp.float32),
        grid=(n_pad // tm,),
        in_specs=[
            pl.BlockSpec((tm, din), lambda i: (i, 0)),   # feat tile
            pl.BlockSpec((din, hdim), lambda i: (0, 0)), # w1 (VMEM-resident)
            pl.BlockSpec((1, hdim), lambda i: (0, 0)),   # b1
            pl.BlockSpec((hdim, p), lambda i: (0, 0)),   # fused w2
            pl.BlockSpec((1, p), lambda i: (0, 0)),      # fused b2
        ],
        out_specs=pl.BlockSpec((tm, p), lambda i: (i, 0)),
        compiler_params=pltpu.CompilerParams(
            dimension_semantics=("parallel",)),
    )(feat_b, w1_b, b1, w2_b, b2)

    cls_prob = out[:n, :n_cls]
    bbox_pred = out[:n, n_cls:n_cls + n_bbox]
    return cls_prob, bbox_pred


# --------------------------- Faster R-CNN module -----------------------------
class FasterRCNNPallas:
    """JAX re-implementation of _fasterRCNN.forward (inference path)."""

    def __init__(self, classes, feat_dim=256, hidden_dim=128,
                 rois_per_image=128, key=None):
        self.classes = classes
        self.n_classes = len(classes)
        self.feat_dim = feat_dim
        self.hidden_dim = hidden_dim
        self.rois_per_image = rois_per_image

        key = jax.random.PRNGKey(0) if key is None else key
        k1, k2, k3, k4 = jax.random.split(key, 4)

        # normal_init(..., 0, 0.01) for head / cls, (..., 0, 0.001) for bbox,
        # biases zeroed — matching _init_weights semantics.
        self.w_head = 0.01 * jax.random.normal(k1, (feat_dim, hidden_dim),
                                               jnp.float32)
        self.b_head = jnp.zeros((1, hidden_dim), jnp.float32)
        self.w_cls = 0.01 * jax.random.normal(k2, (hidden_dim, self.n_classes),
                                              jnp.float32)
        self.b_cls = jnp.zeros((1, self.n_classes), jnp.float32)
        self.w_bbox = 0.001 * jax.random.normal(k3, (hidden_dim,
                                                     4 * self.n_classes),
                                                jnp.float32)
        self.b_bbox = jnp.zeros((1, 4 * self.n_classes), jnp.float32)
        self._base_key = k4

    # ---- synthetic RCNN_base (subclass-defined in PyTorch) ------------------
    def _rcnn_base(self, im_data, im_info, gt_boxes, num_boxes):
        b = im_data.shape[0]
        r = self.rois_per_image
        kr, kf = jax.random.split(self._base_key)
        # rois: (B, R, 5) = [batch_idx, x1, y1, x2, y2]
        batch_idx = jnp.broadcast_to(
            jnp.arange(b, dtype=jnp.float32)[:, None, None], (b, r, 1))
        coords = jax.random.uniform(kr, (b, r, 4), jnp.float32) * 16.0
        rois = jnp.concatenate([batch_idx, coords], axis=-1)
        # pooled ROI features: deterministic projection of image statistics
        # plus per-ROI variation (stand-in for ROI pooling over conv features).
        img_mean = jnp.mean(im_data, axis=(1, 2, 3))                 # (B,)
        feat = (jax.random.normal(kf, (b * r, self.feat_dim), jnp.float32)
                + jnp.repeat(img_mean, r)[:, None])
        rpn_loss_cls = jnp.float32(0.0)
        rpn_loss_bbox = jnp.float32(0.0)
        rois_label = jnp.zeros((b * r,), jnp.int32)
        rois_target = jnp.zeros((b * r, 4 * self.n_classes), jnp.float32)
        rois_inside_ws = jnp.zeros_like(rois_target)
        rois_outside_ws = jnp.zeros_like(rois_target)
        return (rois, feat, rois_label, rois_target, rois_inside_ws,
                rois_outside_ws, rpn_loss_cls, rpn_loss_bbox)

    # ---- forward ------------------------------------------------------------
    def forward(self, im_data, im_info, gt_boxes, num_boxes):
        batch_size = im_data.shape[0]
        (rois, feat_out, _rois_label, _rois_target, _rois_in_ws, _rois_out_ws,
         rpn_loss_cls, rpn_loss_bbox) = self._rcnn_base(
            im_data, im_info, gt_boxes, num_boxes)

        rpn_loss = rpn_loss_cls + rpn_loss_bbox

        # _head_to_tail + fused RCNN_cls_score/RCNN_bbox_pred + softmax.
        cls_prob, bbox_pred = rcnn_head_pallas(
            feat_out, self.w_head, self.b_head,
            self.w_cls, self.b_cls, self.w_bbox, self.b_bbox)

        # eval mode: losses are zero (training branch not exercised)
        rcnn_loss = jnp.float32(0.0)

        n_rois = rois.shape[1]
        cls_prob = cls_prob.reshape(batch_size, n_rois, -1)
        bbox_pred = bbox_pred.reshape(batch_size, n_rois, -1)
        return rois, cls_prob, bbox_pred, rpn_loss, rcnn_loss


# --------------------------------- main --------------------------------------
if __name__ == "__main__":
    key = jax.random.PRNGKey(0)
    k_img, k_info, k_gt, k_model = jax.random.split(key, 4)

    B, C, H, W = 2, 3, 32, 32
    im_data = jax.random.normal(k_img, (B, C, H, W), jnp.float32)   # NCHW
    im_info = jnp.tile(jnp.array([[H, W, 1.0]], jnp.float32), (B, 1))
    gt_boxes = jax.random.uniform(k_gt, (B, 5, 5), jnp.float32) * 16.0
    num_boxes = jnp.full((B,), 5, jnp.int32)

    classes = ["__background__", "a", "b", "c", "d", "e", "f", "g"]  # 8 classes
    # rois_per_image=128 -> N = 256 rows per Pallas call (fills the MXU M dim).
    model = FasterRCNNPallas(classes, feat_dim=256, hidden_dim=128,
                             rois_per_image=128, key=k_model)

    rois, cls_prob, bbox_pred, rpn_loss, rcnn_loss = model.forward(
        im_data, im_info, gt_boxes, num_boxes)

    jax.block_until_ready((rois, cls_prob, bbox_pred, rpn_loss, rcnn_loss))

    # sanity: softmax rows sum to ~1 (approx reciprocal + bf16 MXU operands,
    # so the tolerance is looser than the exact-f32 version).
    R = model.rois_per_image
    assert cls_prob.shape == (B, R, len(classes))
    assert bbox_pred.shape == (B, R, 4 * len(classes))
    assert jnp.allclose(jnp.sum(cls_prob, axis=-1), 1.0, atol=1e-2)
    assert bool(jnp.all(cls_prob >= 0.0))

    print("KERNEL_OK")
</pallas_src>

<mosaic_0001>
module attributes {stable_mosaic.version = 11 : i64} {
  func.func @_rcnn_head_kernel(%arg0: i32, %arg1: memref<128x256xbf16, #tpu.memory_space<vmem>>, %arg2: memref<256x128xbf16, #tpu.memory_space<vmem>>, %arg3: memref<1x128xf32, #tpu.memory_space<vmem>>, %arg4: memref<128x128xbf16, #tpu.memory_space<vmem>>, %arg5: memref<1x128xf32, #tpu.memory_space<vmem>>, %arg6: memref<128x128xf32, #tpu.memory_space<vmem>>) attributes {dimension_semantics = [#tpu.dimension_semantics<parallel>], iteration_bounds = array<i64: 2>, scalar_prefetch = 0 : i64, scratch_operands = 0 : i64, tpu.core_type = #tpu.core_type<tc>, window_params = [{transform_indices = @transform_0, window_bounds = array<i64: 128, 256>}, {pipeline_mode = #tpu.pipeline_mode<synchronous>, transform_indices = @transform_1, window_bounds = array<i64: 256, 128>}, {pipeline_mode = #tpu.pipeline_mode<synchronous>, transform_indices = @transform_2, window_bounds = array<i64: 1, 128>}, {pipeline_mode = #tpu.pipeline_mode<synchronous>, transform_indices = @transform_3, window_bounds = array<i64: 128, 128>}, {pipeline_mode = #tpu.pipeline_mode<synchronous>, transform_indices = @transform_4, window_bounds = array<i64: 1, 128>}, {transform_indices = @transform_5, window_bounds = array<i64: 128, 128>}]} {
    %c0 = arith.constant 0 : index
    %c0_0 = arith.constant 0 : index
    %0 = vector.load %arg1[%c0, %c0_0] : memref<128x256xbf16, #tpu.memory_space<vmem>>, vector<128x256xbf16>
    %c0_1 = arith.constant 0 : index
    %c0_2 = arith.constant 0 : index
    %1 = vector.load %arg2[%c0_1, %c0_2] : memref<256x128xbf16, #tpu.memory_space<vmem>>, vector<256x128xbf16>
    %cst = arith.constant dense<0.000000e+00> : vector<128x128xf32>
    %2 = tpu.matmul %0, %1, %cst {dimension_numbers = #tpu.dot_dimension_numbers<[1], [0], [0], [1], [0, 0, 1, 1], [], []>} : vector<128x256xbf16>, vector<256x128xbf16>, vector<128x128xf32> -> vector<128x128xf32>
    %c0_3 = arith.constant 0 : index
    %c0_4 = arith.constant 0 : index
    %3 = vector.load %arg3[%c0_3, %c0_4] : memref<1x128xf32, #tpu.memory_space<vmem>>, vector<1x128xf32>
    %4 = vector.broadcast %3 : vector<1x128xf32> to vector<128x128xf32>
    %5 = arith.addf %2, %4 : vector<128x128xf32>
    %cst_5 = arith.constant 0.000000e+00 : f32
    %6 = vector.broadcast %cst_5 : f32 to vector<128x128xf32>
    %7 = arith.maximumf %5, %6 : vector<128x128xf32>
    %8 = arith.truncf %7 : vector<128x128xf32> to vector<128x128xbf16>
    %c0_6 = arith.constant 0 : index
    %c0_7 = arith.constant 0 : index
    %9 = vector.load %arg4[%c0_6, %c0_7] : memref<128x128xbf16, #tpu.memory_space<vmem>>, vector<128x128xbf16>
    %cst_8 = arith.constant dense<0.000000e+00> : vector<128x128xf32>
    %10 = tpu.matmul %8, %9, %cst_8 {dimension_numbers = #tpu.dot_dimension_numbers<[1], [0], [0], [1], [0, 0, 1, 1], [], []>} : vector<128x128xbf16>, vector<128x128xbf16>, vector<128x128xf32> -> vector<128x128xf32>
    %c0_9 = arith.constant 0 : index
    %c0_10 = arith.constant 0 : index
    %11 = vector.load %arg5[%c0_9, %c0_10] : memref<1x128xf32, #tpu.memory_space<vmem>>, vector<1x128xf32>
    %12 = vector.broadcast %11 : vector<1x128xf32> to vector<128x128xf32>
    %13 = arith.addf %10, %12 : vector<128x128xf32>
    %14 = tpu.iota {dimensions = array<i32: 1>} : vector<128x128xi32>
    %c8_i32 = arith.constant 8 : i32
    %15 = vector.broadcast %c8_i32 : i32 to vector<128x128xi32>
    %16 = arith.cmpi slt, %14, %15 : vector<128x128xi32>
    %cst_11 = arith.constant 0xFF800000 : f32
    %17 = vector.broadcast %cst_11 : f32 to vector<128x128xf32>
    %18 = arith.select %16, %13, %17 : vector<128x128xi1>, vector<128x128xf32>
    %cst_12 = arith.constant dense<0xFF800000> : vector<128xf32>
    %19 = vector.multi_reduction <maximumf>, %18, %cst_12 [1] : vector<128x128xf32> to vector<128xf32>
    %20 = vector.shape_cast %19 : vector<128xf32> to vector<128x1xf32>
    %21 = vector.broadcast %20 : vector<128x1xf32> to vector<128x128xf32>
    %22 = arith.subf %18, %21 : vector<128x128xf32>
    %23 = math.exp %22 : vector<128x128xf32>
    %cst_13 = arith.constant 0.000000e+00 : f32
    %24 = vector.broadcast %cst_13 : f32 to vector<128x128xf32>
    %25 = arith.select %16, %23, %24 : vector<128x128xi1>, vector<128x128xf32>
    %cst_14 = arith.constant dense<0.000000e+00> : vector<128xf32>
    %26 = vector.multi_reduction <add>, %25, %cst_14 [1] : vector<128x128xf32> to vector<128xf32>
    %27 = vector.shape_cast %26 : vector<128xf32> to vector<128x1xf32>
    %28 = tpu.reciprocal %27 {approx = true} : vector<128x1xf32> -> vector<128x1xf32>
    %29 = vector.broadcast %28 : vector<128x1xf32> to vector<128x128xf32>
    %30 = arith.mulf %25, %29 : vector<128x128xf32>
    %31 = arith.select %16, %30, %13 : vector<128x128xi1>, vector<128x128xf32>
    %c0_15 = arith.constant 0 : index
    %c0_16 = arith.constant 0 : index
    %32 = vector.load %arg6[%c0_15, %c0_16] : memref<128x128xf32, #tpu.memory_space<vmem>>, vector<128x128xf32>
    tpu.vector_store %arg6[%c0_15, %c0_16], %31 {strides = array<i32>} : memref<128x128xf32, #tpu.memory_space<vmem>>, vector<128x128xf32>,
    return
  }
  func.func @transform_0(%arg0: i32) -> (i32, i32) {
    %c0_i32 = arith.constant 0 : i32
    %c0_i32_0 = arith.constant 0 : i32
    return %arg0, %c0_i32 : i32, i32
  }
  func.func @transform_1(%arg0: i32) -> (i32, i32) {
    %c0_i32 = arith.constant 0 : i32
    %c0_i32_0 = arith.constant 0 : i32
    %c0_i32_1 = arith.constant 0 : i32
    return %c0_i32, %c0_i32_0 : i32, i32
  }
  func.func @transform_2(%arg0: i32) -> (i32, i32) {
    %c0_i32 = arith.constant 0 : i32
    %c0_i32_0 = arith.constant 0 : i32
    %c0_i32_1 = arith.constant 0 : i32
    return %c0_i32, %c0_i32_0 : i32, i32
  }
  func.func @transform_3(%arg0: i32) -> (i32, i32) {
    %c0_i32 = arith.constant 0 : i32
    %c0_i32_0 = arith.constant 0 : i32
    %c0_i32_1 = arith.constant 0 : i32
    return %c0_i32, %c0_i32_0 : i32, i32
  }
  func.func @transform_4(%arg0: i32) -> (i32, i32) {
    %c0_i32 = arith.constant 0 : i32
    %c0_i32_0 = arith.constant 0 : i32
    %c0_i32_1 = arith.constant 0 : i32
    return %c0_i32, %c0_i32_0 : i32, i32
  }
  func.func @transform_5(%arg0: i32) -> (i32, i32) {
    %c0_i32 = arith.constant 0 : i32
    %c0_i32_0 = arith.constant 0 : i32
    return %arg0, %c0_i32 : i32, i32
  }
}

</mosaic_0001>

<llo_original>
// kernel: tpu_custom_call.1
$region0: #{tpu_custom_call.1}
  #allocation0 [shape = 'u32[]', space=smem, size = 0x4, offset = 0x4, fixed_abs, tag = 'smem constant byte address 0x4 - core index']
  #allocation1 [shape = 'u32[144,128]{1,0:T(1,128)}', space=vmem, size = 0x12000, scoped, tag = 'internal scratch']
  %s0 = inlined_call_operand.hbm [shape: bf16[256,256], index: 0, kind: input, shape index: {}]
  %s1 = inlined_call_operand.hbm [shape: bf16[256,128], index: 1, kind: input, shape index: {}]
  %s2 = inlined_call_operand.vmem [shape: f32[1,128], index: 2, kind: input, shape index: {}]
  %s3 = inlined_call_operand.hbm [shape: bf16[128,128], index: 3, kind: input, shape index: {}]
  %s4 = inlined_call_operand.vmem [shape: f32[1,128], index: 4, kind: input, shape index: {}]
  %s5 = inlined_call_operand.hbm [shape: f32[256,128], index: 5, kind: output, shape index: {}]
  %s6 = sld [smem:[#allocation0]]
  $region65: #{tpu_custom_call.1} parent=0
    _
  %s8 = ssub.s32 1, %s6
  %s9 = scalar_select 0, %s8, %s6
  $region1: #{tpu_custom_call.1} parent=0
    #allocation2 [shape = 'u8[131072]{0}', space=vmem, size = 0x20000, scoped, tag = 'input window, operand 0']
    #allocation3 [shape = 's32[2]{0}', space=sflag, size = 0x8, scoped, tag = 'scoped memory for tpu_custom_call.1']
    #allocation4 [shape = 's32[2]{0}', space=sflag, size = 0x8, scoped, tag = 'scoped memory for tpu_custom_call.1']
    #allocation5 [shape = 'u8[65536]{0}', space=vmem, size = 0x10000, scoped, tag = 'input window, operand 1, single buffered']
    #allocation6 [shape = 's32[1]{0}', space=sflag, size = 0x4, scoped, tag = 'scoped memory for tpu_custom_call.1']
    #allocation7 [shape = 'u8[32768]{0}', space=vmem, size = 0x8000, scoped, tag = 'input window, operand 3, single buffered']
    #allocation8 [shape = 'u8[131072]{0}', space=vmem, size = 0x20000, scoped, tag = 'output window, operand 0']
    %10 = vsyncpa [#allocation3], 0
    %s11 = scalar_lea.sflag [#allocation3], 1
    %12 = vsyncpa %s11, 0
    %13 = vsyncpa [#allocation6], 0
    %14 = vsyncpa [#allocation4], 0
    %s15 = scalar_lea.sflag [#allocation4], 1
    %16 = vsyncpa %s15, 0
    loop: start=0, step=1, limit=4
    $region2: #{tpu_custom_call.1} parent=1 // loop_pre_header
      _
    $region3: #{tpu_custom_call.1} parent=1 // loop_header
      %s18 = sphi 0, %s22
      %p19 = scmp.ge.s32.totalorder %s18, 4
      %s28 = sphi 0, %s30
      %s31 = sphi 0, %s28
      %s32 = sphi 0, %s31
      %s48 = sphi 0, %s32
      %s52 = sphi 0, %s52
      %s54 = sphi 0, %s52
      %s55 = sphi 0, %s54
      %s69 = sphi 0, %s55
      %s73 = sphi 0, %s73
      %s75 = sphi 0, %s73
      %s76 = sphi 0, %s75
      %s90 = sphi 0, %s76
      %s94 = sphi 0, %s94
      %s96 = sphi 0, %s94
      %s97 = sphi 0, %s96
      %s111 = sphi 0, %s97
      %s115 = sphi 0, %s115
      %s117 = sphi 0, %s115
      %s118 = sphi 0, %s117
      %s132 = sphi 0, %s118
      %s138 = sphi 0, %s140
      %s141 = sphi 0, %s138
      %s142 = sphi 0, %s141
      %s158 = sphi 0, %s142
    $region4: #{tpu_custom_call.1} parent=1 // loop_header_branch
      %21 = sbr.rel (%p19) target = $region8
    $region5: #{tpu_custom_call.1} parent=1 // loop_body
      %s23 = ssub.s32 %s18, 1
      %s24 = ssub.s32 %s18, 2
      %s25 = sadd.s32 %s18, 1
      %s26 = ssub.s32 %s18, %s25
      %p27 = scmp.eq.s32.totalorder %s26, 0
      %s29 = sadd.s32 %s28, 1
      %s30 = scalar_select %p27, %s28, %s29
      %p33 = pneg %p27
      %p34 = scmp.eq.s32.totalorder %s18, 1
      %p35 = por %p33, %p34
      %p36 = scmp.ne.s32.totalorder %s28, %s31
      %p37 = scmp.eq.s32.totalorder %s18, 0
      %p38 = por %p36, %p37
      %p39 = scmp.ne.s32.totalorder %s28, %s31
      %p40 = scmp.eq.s32.totalorder %s23, 1
      %p41 = por %p39, %p40
      %p42 = scmp.ne.s32.totalorder %s31, %s32
      %p43 = scmp.eq.s32.totalorder %s23, 0
      %p44 = por %p42, %p43
      %p45 = scmp.ne.s32.totalorder %s31, %s32
      %p46 = scmp.eq.s32.totalorder %s24, 1
      %p47 = por %p45, %p46
      %p49 = scmp.ne.s32.totalorder %s32, %s48
      %p50 = scmp.eq.s32.totalorder %s24, 0
      %p51 = por %p49, %p50
      %s53 = sadd.s32 %s52, 1
      %p56 = scmp.eq.s32.totalorder %s18, 1
      %p57 = scmp.ne.s32.totalorder %s52, %s54
      %p58 = scmp.eq.s32.totalorder %s18, 0
      %p59 = por %p57, %p58
      %p60 = scmp.ne.s32.totalorder %s52, %s54
      %p61 = scmp.eq.s32.totalorder %s23, 1
      %p62 = por %p60, %p61
      %p63 = scmp.ne.s32.totalorder %s54, %s55
      %p64 = scmp.eq.s32.totalorder %s23, 0
      %p65 = por %p63, %p64
      %p66 = scmp.ne.s32.totalorder %s54, %s55
      %p67 = scmp.eq.s32.totalorder %s24, 1
      %p68 = por %p66, %p67
      %p70 = scmp.ne.s32.totalorder %s55, %s69
      %p71 = scmp.eq.s32.totalorder %s24, 0
      %p72 = por %p70, %p71
      %s74 = sadd.s32 %s73, 1
      %p77 = scmp.eq.s32.totalorder %s18, 1
      %p78 = scmp.ne.s32.totalorder %s73, %s75
      %p79 = scmp.eq.s32.totalorder %s18, 0
      %p80 = por %p78, %p79
      %p81 = scmp.ne.s32.totalorder %s73, %s75
      %p82 = scmp.eq.s32.totalorder %s23, 1
      %p83 = por %p81, %p82
      %p84 = scmp.ne.s32.totalorder %s75, %s76
      %p85 = scmp.eq.s32.totalorder %s23, 0
      %p86 = por %p84, %p85
      %p87 = scmp.ne.s32.totalorder %s75, %s76
      %p88 = scmp.eq.s32.totalorder %s24, 1
      %p89 = por %p87, %p88
      %p91 = scmp.ne.s32.totalorder %s76, %s90
      %p92 = scmp.eq.s32.totalorder %s24, 0
      %p93 = por %p91, %p92
      %s95 = sadd.s32 %s94, 1
      %p98 = scmp.eq.s32.totalorder %s18, 1
      %p99 = scmp.ne.s32.totalorder %s94, %s96
      %p100 = scmp.eq.s32.totalorder %s18, 0
      %p101 = por %p99, %p100
      %p102 = scmp.ne.s32.totalorder %s94, %s96
      %p103 = scmp.eq.s32.totalorder %s23, 1
      %p104 = por %p102, %p103
      %p105 = scmp.ne.s32.totalorder %s96, %s97
      %p106 = scmp.eq.s32.totalorder %s23, 0
      %p107 = por %p105, %p106
      %p108 = scmp.ne.s32.totalorder %s96, %s97
      %p109 = scmp.eq.s32.totalorder %s24, 1
      %p110 = por %p108, %p109
      %p112 = scmp.ne.s32.totalorder %s97, %s111
      %p113 = scmp.eq.s32.totalorder %s24, 0
      %p114 = por %p112, %p113
      %s116 = sadd.s32 %s115, 1
      %p119 = scmp.eq.s32.totalorder %s18, 1
      %p120 = scmp.ne.s32.totalorder %s115, %s117
      %p121 = scmp.eq.s32.totalorder %s18, 0
      %p122 = por %p120, %p121
      %p123 = scmp.ne.s32.totalorder %s115, %s117
      %p124 = scmp.eq.s32.totalorder %s23, 1
      %p125 = por %p123, %p124
      %p126 = scmp.ne.s32.totalorder %s117, %s118
      %p127 = scmp.eq.s32.totalorder %s23, 0
      %p128 = por %p126, %p127
      %p129 = scmp.ne.s32.totalorder %s117, %s118
      %p130 = scmp.eq.s32.totalorder %s24, 1
      %p131 = por %p129, %p130
      %p133 = scmp.ne.s32.totalorder %s118, %s132
      %p134 = scmp.eq.s32.totalorder %s24, 0
      %p135 = por %p133, %p134
      %s136 = ssub.s32 %s18, %s25
      %p137 = scmp.eq.s32.totalorder %s136, 0
      %s139 = sadd.s32 %s138, 1
      %s140 = scalar_select %p137, %s138, %s139
      %p143 = pneg %p137
      %p144 = scmp.eq.s32.totalorder %s18, 1
      %p145 = por %p143, %p144
      %p146 = scmp.ne.s32.totalorder %s138, %s141
      %p147 = scmp.eq.s32.totalorder %s18, 0
      %p148 = por %p146, %p147
      %p149 = scmp.ne.s32.totalorder %s138, %s141
      %p150 = scmp.eq.s32.totalorder %s23, 1
      %p151 = por %p149, %p150
      %p152 = scmp.ne.s32.totalorder %s141, %s142
      %p153 = scmp.eq.s32.totalorder %s23, 0
      %p154 = por %p152, %p153
      %p155 = scmp.ne.s32.totalorder %s141, %s142
      %p156 = scmp.eq.s32.totalorder %s24, 1
      %p157 = por %p155, %p156
      %p159 = scmp.ne.s32.totalorder %s142, %s158
      %p160 = scmp.eq.s32.totalorder %s24, 0
      %p161 = por %p159, %p160
      %p162 = scmp.le.s32.totalorder 1, %s18
      %p163 = scmp.lt.s32.totalorder %s18, 3
      %p164 = pnand %p162, %p163
      %p165 = pneg %p164
      // Predicated region
      $region9: #{tpu_custom_call.1} parent=5 // pred_check
        _
      $region10: #{tpu_custom_call.1} parent=5 // pred_check_branch
        %167 = sbr.rel (%p164) target = $region12
      $region11: #{tpu_custom_call.1} parent=5 // pred_region
        %s168 = ssub.s32 %s18, 1
        // Predicated region
        $region13: #{tpu_custom_call.1} parent=11 // pred_check
          %p169 = pneg %p65
        $region14: #{tpu_custom_call.1} parent=11 // pred_check_branch
          %171 = sbr.rel (%p169) target = $region16
        $region15: #{tpu_custom_call.1} parent=11 // pred_region
          %s173 = ssub.s32 2048, 2048
          %174 = vsyncadd [#allocation6], %s173
          %s175 = sshll.u32 [#allocation5], 4
          %s176 = int_to_ptr.vmem [resolvable:$true] %s175
          %181 = dma.hbm_to_vmem [thread:$0]  %s1, 2048, %s176, [#allocation6], 64, 64, 4
        $region16: #{tpu_custom_call.1} parent=11 // pred_fallthru
          _
        // Predicated region
        $region17: #{tpu_custom_call.1} parent=11 // pred_check
          %p182 = pneg %p86
        $region18: #{tpu_custom_call.1} parent=11 // pred_check_branch
          %184 = sbr.rel (%p182) target = $region20
        $region19: #{tpu_custom_call.1} parent=11 // pred_region
          _
        $region20: #{tpu_custom_call.1} parent=11 // pred_fallthru
          _
        // Predicated region
        $region21: #{tpu_custom_call.1} parent=11 // pred_check
          %p185 = pneg %p107
        $region22: #{tpu_custom_call.1} parent=11 // pred_check_branch
          %187 = sbr.rel (%p185) target = $region24
        $region23: #{tpu_custom_call.1} parent=11 // pred_region
          %s189 = ssub.s32 1024, 1024
          %190 = vsyncadd [#allocation6], %s189
          %s191 = sshll.u32 [#allocation7], 4
          %s192 = int_to_ptr.vmem [resolvable:$true] %s191
          %197 = dma.hbm_to_vmem [thread:$0]  %s3, 1024, %s192, [#allocation6], 64, 64, 4
        $region24: #{tpu_custom_call.1} parent=11 // pred_fallthru
          _
        // Predicated region
        $region25: #{tpu_custom_call.1} parent=11 // pred_check
          %p198 = pneg %p128
        $region26: #{tpu_custom_call.1} parent=11 // pred_check_branch
          %200 = sbr.rel (%p198) target = $region28
        $region27: #{tpu_custom_call.1} parent=11 // pred_region
          _
        $region28: #{tpu_custom_call.1} parent=11 // pred_fallthru
          _
      $region12: #{tpu_custom_call.1} parent=5 // pred_fallthru
        _
      %p201 = scmp.lt.s32.totalorder %s18, 2
      // Predicated region
      $region29: #{tpu_custom_call.1} parent=5 // pred_check
        %p202 = pneg %p201
      $region30: #{tpu_custom_call.1} parent=5 // pred_check_branch
        %204 = sbr.rel (%p202) target = $region32
      $region31: #{tpu_custom_call.1} parent=5 // pred_region
        // Predicated region
        $region33: #{tpu_custom_call.1} parent=31 // pred_check
          %p205 = pneg %p38
        $region34: #{tpu_custom_call.1} parent=31 // pred_check_branch
          %207 = sbr.rel (%p205) target = $region36
        $region35: #{tpu_custom_call.1} parent=31 // pred_region
          %s208 = sand.u32 %s28, 1
          %s209 = scalar_lea.sflag [#allocation3], %s208
          %s210 = sand.u32 %s28, 1
          %s211 = smul.addr %s210, 128
          %s212 = scalar_lea.vmem [#allocation2], %s211
          %s213 = smul.u32 16, %s18
          %s215 = ssub.s32 2048, 2048
          %216 = vsyncadd %s209, %s215
          %s217 = smul.addr %s213, 2
          %s218 = smul.addr %s217, 64
          %s219 = scalar_lea.hbm %s0, %s218
          %s220 = sshll.u32 %s212, 4
          %s221 = int_to_ptr.vmem [resolvable:$true] %s220
          %226 = dma.hbm_to_vmem [thread:$0]  %s219, 2048, %s221, %s209, 128, 128, 8
        $region36: #{tpu_custom_call.1} parent=31 // pred_fallthru
          _
      $region32: #{tpu_custom_call.1} parent=5 // pred_fallthru
        _
      %p227 = scmp.le.s32.totalorder 1, %s18
      %p228 = scmp.lt.s32.totalorder %s18, 3
      %p229 = pnand %p227, %p228
      %p230 = pneg %p229
      // Predicated region
      $region37: #{tpu_custom_call.1} parent=5 // pred_check
        _
      $region38: #{tpu_custom_call.1} parent=5 // pred_check_branch
        %232 = sbr.rel (%p229) target = $region40
      $region39: #{tpu_custom_call.1} parent=5 // pred_region
        %s233 = ssub.s32 %s18, 1
        %s234 = sand.u32 %s31, 1
        %s235 = scalar_lea.sflag [#allocation3], %s234
        %s236 = sand.u32 %s31, 1
        %s237 = smul.addr %s236, 128
        %s238 = scalar_lea.vmem [#allocation2], %s237
        // Predicated region
        $region41: #{tpu_custom_call.1} parent=39 // pred_check
          %p239 = pneg %p44
        $region42: #{tpu_custom_call.1} parent=39 // pred_check_branch
          %241 = sbr.rel (%p239) target = $region44
        $region43: #{tpu_custom_call.1} parent=39 // pred_region
          %242 = dma.done %s235, 2048
        $region44: #{tpu_custom_call.1} parent=39 // pred_fallthru
          _
        // Predicated region
        $region45: #{tpu_custom_call.1} parent=39 // pred_check
          %p243 = pneg %p65
        $region46: #{tpu_custom_call.1} parent=39 // pred_check_branch
          %245 = sbr.rel (%p243) target = $region48
        $region47: #{tpu_custom_call.1} parent=39 // pred_region
          %246 = dma.done [#allocation6], 2048
        $region48: #{tpu_custom_call.1} parent=39 // pred_fallthru
          _
        // Predicated region
        $region49: #{tpu_custom_call.1} parent=39 // pred_check
          %p247 = pneg %p107
        $region50: #{tpu_custom_call.1} parent=39 // pred_check_branch
          %249 = sbr.rel (%p247) target = $region52
        $region51: #{tpu_custom_call.1} parent=39 // pred_region
          %250 = dma.done [#allocation6], 1024
        $region52: #{tpu_custom_call.1} parent=39 // pred_fallthru
          _
        %s251 = sand.u32 %s31, 1
        %s252 = scalar_lea.sflag [#allocation3], %s251
        %s253 = sand.u32 %s31, 1
        %s254 = smul.addr %s253, 128
        %s255 = scalar_lea.vmem [#allocation2], %s254
        %p256 = pneg %p44
        %p257 = pneg %p41
        %p258 = pneg %p65
        %p259 = pneg %p62
        %p260 = pneg %p86
        %p261 = pneg %p83
        %p262 = pneg %p107
        %p263 = pneg %p104
        %p264 = pneg %p128
        %p265 = pneg %p125
        %p266 = pneg %p154
        %p267 = pneg %p151
        %s268 = sand.u32 %s141, 1
        %s269 = scalar_lea.sflag [#allocation4], %s268
        %s270 = sand.u32 %s141, 1
        %s271 = smul.addr %s270, 128
        %s272 = scalar_lea.vmem [#allocation8], %s271
        %s273 = smul.u32 16, %s23
        %s274 = smul.u32 16, %s23
        %v276 = vld [vmem:[%s238] sm:$0xff]
        %v277 = vld [vmem:[%s238 + $0x8] sm:$0xff]
        %v278 = vld [vmem:[%s238 + $0x10] sm:$0xff]
        %v279 = vld [vmem:[%s238 + $0x18] sm:$0xff]
        %v280 = vld [vmem:[%s238 + $0x20] sm:$0xff]
        %v281 = vld [vmem:[%s238 + $0x28] sm:$0xff]
        %v282 = vld [vmem:[%s238 + $0x30] sm:$0xff]
        %v283 = vld [vmem:[%s238 + $0x38] sm:$0xff]
        %v284 = vld [vmem:[%s238 + $0x40] sm:$0xff]
        %v285 = vld [vmem:[%s238 + $0x48] sm:$0xff]
        %v286 = vld [vmem:[%s238 + $0x50] sm:$0xff]
        %v287 = vld [vmem:[%s238 + $0x58] sm:$0xff]
        %v288 = vld [vmem:[%s238 + $0x60] sm:$0xff]
        %v289 = vld [vmem:[%s238 + $0x68] sm:$0xff]
        %v290 = vld [vmem:[%s238 + $0x70] sm:$0xff]
        %v291 = vld [vmem:[%s238 + $0x78] sm:$0xff]
        %v292 = vld [vmem:[#allocation5] sm:$0xf]
        %v293 = vld [vmem:[#allocation5 + $0x4] sm:$0xf]
        %v294 = vld [vmem:[#allocation5 + $0x8] sm:$0xf]
        %v295 = vld [vmem:[#allocation5 + $0xc] sm:$0xf]
        %v296 = vld [vmem:[#allocation5 + $0x10] sm:$0xf]
        %v297 = vld [vmem:[#allocation5 + $0x14] sm:$0xf]
        %v298 = vld [vmem:[#allocation5 + $0x18] sm:$0xf]
        %v299 = vld [vmem:[#allocation5 + $0x1c] sm:$0xf]
        %v300 = vld [vmem:[#allocation5 + $0x20] sm:$0xf]
        %v301 = vld [vmem:[#allocation5 + $0x24] sm:$0xf]
        %v302 = vld [vmem:[#allocation5 + $0x28] sm:$0xf]
        %v303 = vld [vmem:[#allocation5 + $0x2c] sm:$0xf]
        %v304 = vld [vmem:[#allocation5 + $0x30] sm:$0xf]
        %v305 = vld [vmem:[#allocation5 + $0x34] sm:$0xf]
        %v306 = vld [vmem:[#allocation5 + $0x38] sm:$0xf]
        %v307 = vld [vmem:[#allocation5 + $0x3c] sm:$0xf]
        %v308 = vld [vmem:[#allocation5 + $0x40] sm:$0xf]
        %v309 = vld [vmem:[#allocation5 + $0x44] sm:$0xf]
        %v310 = vld [vmem:[#allocation5 + $0x48] sm:$0xf]
        %v311 = vld [vmem:[#allocation5 + $0x4c] sm:$0xf]
        %v312 = vld [vmem:[#allocation5 + $0x50] sm:$0xf]
        %v313 = vld [vmem:[#allocation5 + $0x54] sm:$0xf]
        %v314 = vld [vmem:[#allocation5 + $0x58] sm:$0xf]
        %v315 = vld [vmem:[#allocation5 + $0x5c] sm:$0xf]
        %v316 = vld [vmem:[#allocation5 + $0x60] sm:$0xf]
        %v317 = vld [vmem:[#allocation5 + $0x64] sm:$0xf]
        %v318 = vld [vmem:[#allocation5 + $0x68] sm:$0xf]
        %v319 = vld [vmem:[#allocation5 + $0x6c] sm:$0xf]
        %v320 = vld [vmem:[#allocation5 + $0x70] sm:$0xf]
        %v321 = vld [vmem:[#allocation5 + $0x74] sm:$0xf]
        %v322 = vld [vmem:[#allocation5 + $0x78] sm:$0xf]
        %v323 = vld [vmem:[#allocation5 + $0x7c] sm:$0xf]
        %v324 = vld [vmem:[%s2] sm:$0x1]
        %v326 = vlaneseq
        %v327 = vshrl.u32 %v326, 7
        %v328 = vsub.s32 0, %v327
        %v329 = vrot.slane %v324, %v328
        %v347 = vunpack.c.l.b16 %v276
        %v348 = vunpack.c.h.b16 %v276
        %v349 = vunpack.c.l.b16 %v277
        %v350 = vunpack.c.h.b16 %v277
        %v351 = vunpack.c.l.b16 %v278
        %v352 = vunpack.c.h.b16 %v278
        %v353 = vunpack.c.l.b16 %v279
        %v354 = vunpack.c.h.b16 %v279
        %v355 = vunpack.c.l.b16 %v280
        %v356 = vunpack.c.h.b16 %v280
        %v357 = vunpack.c.l.b16 %v281
        %v358 = vunpack.c.h.b16 %v281
        %v359 = vunpack.c.l.b16 %v282
        %v360 = vunpack.c.h.b16 %v282
        %v361 = vunpack.c.l.b16 %v283
        %v362 = vunpack.c.h.b16 %v283
        %v363 = vunpack.c.l.b16 %v284
        %v364 = vunpack.c.h.b16 %v284
        %v365 = vunpack.c.l.b16 %v285
        %v366 = vunpack.c.h.b16 %v285
        %v367 = vunpack.c.l.b16 %v286
        %v368 = vunpack.c.h.b16 %v286
        %v369 = vunpack.c.l.b16 %v287
        %v370 = vunpack.c.h.b16 %v287
        %v371 = vunpack.c.l.b16 %v288
        %v372 = vunpack.c.h.b16 %v288
        %v373 = vunpack.c.l.b16 %v289
        %v374 = vunpack.c.h.b16 %v289
        %v375 = vunpack.c.l.b16 %v290
        %v376 = vunpack.c.h.b16 %v290
        %v377 = vunpack.c.l.b16 %v291
        %v378 = vunpack.c.h.b16 %v291
        %v379 = vpack.c.b16 %v349, %v347
        %v380 = vpack.c.b16 %v350, %v348
        %v381 = vpack.c.b16 %v353, %v351
        %v382 = vpack.c.b16 %v354, %v352
        %v383 = vpack.c.b16 %v357, %v355
        %v384 = vpack.c.b16 %v358, %v356
        %v385 = vpack.c.b16 %v361, %v359
        %v386 = vpack.c.b16 %v362, %v360
        %v387 = vpack.c.b16 %v365, %v363
        %v388 = vpack.c.b16 %v366, %v364
        %v389 = vpack.c.b16 %v369, %v367
        %v390 = vpack.c.b16 %v370, %v368
        %v391 = vpack.c.b16 %v373, %v371
        %v392 = vpack.c.b16 %v374, %v372
        %v393 = vpack.c.b16 %v377, %v375
        %v394 = vpack.c.b16 %v378, %v376
        %v443 = vunpack.c.l.b16 %v292
        %v444 = vunpack.c.l.b16 %v293
        %v445 = vunpack.c.l.b16 %v294
        %v446 = vunpack.c.l.b16 %v295
        %v447 = vunpack.c.l.b16 %v296
        %v448 = vunpack.c.l.b16 %v297
        %v449 = vunpack.c.l.b16 %v298
        %v450 = vunpack.c.l.b16 %v299
        %v451 = vunpack.c.l.b16 %v300
        %v452 = vunpack.c.l.b16 %v301
        %v453 = vunpack.c.l.b16 %v302
        %v454 = vunpack.c.l.b16 %v303
        %v455 = vunpack.c.l.b16 %v304
        %v456 = vunpack.c.l.b16 %v305
        %v457 = vunpack.c.l.b16 %v306
        %v458 = vunpack.c.l.b16 %v307
        %v459 = vunpack.c.l.b16 %v308
        %v460 = vunpack.c.l.b16 %v309
        %v461 = vunpack.c.l.b16 %v310
        %v462 = vunpack.c.l.b16 %v311
        %v463 = vunpack.c.l.b16 %v312
        %v464 = vunpack.c.l.b16 %v313
        %v465 = vunpack.c.l.b16 %v314
        %v466 = vunpack.c.l.b16 %v315
        %v467 = vunpack.c.l.b16 %v316
        %v468 = vunpack.c.l.b16 %v317
        %v469 = vunpack.c.l.b16 %v318
        %v470 = vunpack.c.l.b16 %v319
        %v471 = vunpack.c.l.b16 %v320
        %v472 = vunpack.c.l.b16 %v321
        %v473 = vunpack.c.l.b16 %v322
        %v474 = vunpack.c.l.b16 %v323
        %v475 = vpack.c.b16 %v444, %v443
        %v476 = vpack.c.b16 %v446, %v445
        %v477 = vpack.c.b16 %v448, %v447
        %v478 = vpack.c.b16 %v450, %v449
        %v479 = vpack.c.b16 %v452, %v451
        %v480 = vpack.c.b16 %v454, %v453
        %v481 = vpack.c.b16 %v456, %v455
        %v482 = vpack.c.b16 %v458, %v457
        %v483 = vpack.c.b16 %v460, %v459
        %v484 = vpack.c.b16 %v462, %v461
        %v485 = vpack.c.b16 %v464, %v463
        %v486 = vpack.c.b16 %v466, %v465
        %v487 = vpack.c.b16 %v468, %v467
        %v488 = vpack.c.b16 %v470, %v469
        %v489 = vpack.c.b16 %v472, %v471
        %v490 = vpack.c.b16 %v474, %v473
        %507 = vmatprep.subr.bf16.mxu0 0
        %508 = vmatpush1.bf16.msra.mxu0 %v475
        %509 = vmatprep.subr.bf16.mxu0 0
        %510 = vmatpush1.bf16.msra.mxu0 %v476
        %511 = vmatprep.subr.bf16.mxu0 0
        %512 = vmatpush1.bf16.msra.mxu0 %v477
        %513 = vmatprep.subr.bf16.mxu0 0
        %514 = vmatpush1.bf16.msra.mxu0 %v478
        %515 = vmatprep.subr.bf16.mxu0 0
        %516 = vmatpush1.bf16.msra.mxu0 %v479
        %517 = vmatprep.subr.bf16.mxu0 0
        %518 = vmatpush1.bf16.msra.mxu0 %v480
        %519 = vmatprep.subr.bf16.mxu0 0
        %520 = vmatpush1.bf16.msra.mxu0 %v481
        %521 = vmatprep.subr.bf16.mxu0 0
        %522 = vmatpush1.bf16.msra.mxu0 %v482
        %523 = vmatprep.subr.bf16.mxu0 0
        %524 = vmatpush1.bf16.msra.mxu0 %v483
        %525 = vmatprep.subr.bf16.mxu0 0
        %526 = vmatpush1.bf16.msra.mxu0 %v484
        %527 = vmatprep.subr.bf16.mxu0 0
        %528 = vmatpush1.bf16.msra.mxu0 %v485
        %529 = vmatprep.subr.bf16.mxu0 0
        %530 = vmatpush1.bf16.msra.mxu0 %v486
        %531 = vmatprep.subr.bf16.mxu0 0
        %532 = vmatpush1.bf16.msra.mxu0 %v487
        %533 = vmatprep.subr.bf16.mxu0 0
        %534 = vmatpush1.bf16.msra.mxu0 %v488
        %535 = vmatprep.subr.bf16.mxu0 0
        %536 = vmatpush1.bf16.msra.mxu0 %v489
        %537 = vmatprep.subr.bf16.mxu0 0
        %538 = vmatpush1.bf16.msra.mxu0 %v490
        %539 = vmatprep.mubr.bf16.mxu0 %v380
        %540 = vmatmul.mubr.bf16.gmra.mrb[0].mxu0 %v379
        %v541 = vpop.f32.mrb[0].mxu0
        %v542 = vadd.f32 %v329, %v541
        %v543 = vpop.f32.mrb[0].mxu0
        %v544 = vpop.f32.mrb[0].mxu0
        %v545 = vadd.f32 %v329, %v544
        %v546 = vpop.f32.mrb[0].mxu0
        %547 = vmatprep.mubr.bf16.mxu0 %v382
        %548 = vmatmul.mubr.bf16.gmra.mrb[0].mxu0 %v381
        %v549 = vpop.f32.mrb[0].mxu0
        %v550 = vadd.f32 %v329, %v549
        %v551 = vpop.f32.mrb[0].mxu0
        %v552 = vpop.f32.mrb[0].mxu0
        %v553 = vadd.f32 %v329, %v552
        %v554 = vpop.f32.mrb[0].mxu0
        %555 = vmatprep.mubr.bf16.mxu0 %v384
        %556 = vmatmul.mubr.bf16.gmra.mrb[0].mxu0 %v383
        %v557 = vpop.f32.mrb[0].mxu0
        %v558 = vadd.f32 %v329, %v557
        %v559 = vpop.f32.mrb[0].mxu0
        %v560 = vpop.f32.mrb[0].mxu0
        %v561 = vadd.f32 %v329, %v560
        %v562 = vpop.f32.mrb[0].mxu0
        %563 = vmatprep.mubr.bf16.mxu0 %v386
        %564 = vmatmul.mubr.bf16.gmra.mrb[0].mxu0 %v385
        %v565 = vpop.f32.mrb[0].mxu0
        %v566 = vadd.f32 %v329, %v565
        %v567 = vpop.f32.mrb[0].mxu0
        %v568 = vpop.f32.mrb[0].mxu0
        %v569 = vadd.f32 %v329, %v568
        %v570 = vpop.f32.mrb[0].mxu0
        %571 = vmatprep.mubr.bf16.mxu0 %v388
        %572 = vmatmul.mubr.bf16.gmra.mrb[0].mxu0 %v387
        %v573 = vpop.f32.mrb[0].mxu0
        %v574 = vadd.f32 %v329, %v573
        %v575 = vpop.f32.mrb[0].mxu0
        %v576 = vpop.f32.mrb[0].mxu0
        %v577 = vadd.f32 %v329, %v576
        %v578 = vpop.f32.mrb[0].mxu0
        %579 = vmatprep.mubr.bf16.mxu0 %v390
        %580 = vmatmul.mubr.bf16.gmra.mrb[0].mxu0 %v389
        %v581 = vpop.f32.mrb[0].mxu0
        %v582 = vadd.f32 %v329, %v581
        %v583 = vpop.f32.mrb[0].mxu0
        %v584 = vpop.f32.mrb[0].mxu0
        %v585 = vadd.f32 %v329, %v584
        %v586 = vpop.f32.mrb[0].mxu0
        %587 = vmatprep.mubr.bf16.mxu0 %v392
        %588 = vmatmul.mubr.bf16.gmra.mrb[0].mxu0 %v391
        %v589 = vpop.f32.mrb[0].mxu0
        %v590 = vadd.f32 %v329, %v589
        %v591 = vpop.f32.mrb[0].mxu0
        %v592 = vpop.f32.mrb[0].mxu0
        %v593 = vadd.f32 %v329, %v592
        %v594 = vpop.f32.mrb[0].mxu0
        %595 = vmatprep.mubr.bf16.mxu0 %v394
        %596 = vmatmul.mubr.bf16.gmra.mrb[0].mxu0 %v393
        %v597 = vpop.f32.mrb[0].mxu0
        %v598 = vadd.f32 %v329, %v597
        %v599 = vpop.f32.mrb[0].mxu0
        %v600 = vpop.f32.mrb[0].mxu0
        %v601 = vadd.f32 %v329, %v600
        %v602 = vpop.f32.mrb[0].mxu0
        %603 = vdwg.mxu0
        %v604 = vmax.f32 %v542, 0.0
        %v605 = vmax.f32 %v545, 0.0
        %v606 = vmax.f32 %v550, 0.0
        %v607 = vmax.f32 %v553, 0.0
        %v608 = vmax.f32 %v558, 0.0
        %v609 = vmax.f32 %v561, 0.0
        %v610 = vmax.f32 %v566, 0.0
        %v611 = vmax.f32 %v569, 0.0
        %v612 = vmax.f32 %v574, 0.0
        %v613 = vmax.f32 %v577, 0.0
        %v614 = vmax.f32 %v582, 0.0
        %v615 = vmax.f32 %v585, 0.0
        %v616 = vmax.f32 %v590, 0.0
        %v617 = vmax.f32 %v593, 0.0
        %v618 = vmax.f32 %v598, 0.0
        %v619 = vmax.f32 %v601, 0.0
        %v620 = vpack.c.bf16 %v605, %v604
        %v621 = vpack.c.bf16 %v607, %v606
        %v622 = vpack.c.bf16 %v609, %v608
        %v623 = vpack.c.bf16 %v611, %v610
        %v624 = vpack.c.bf16 %v613, %v612
        %v625 = vpack.c.bf16 %v615, %v614
        %v626 = vpack.c.bf16 %v617, %v616
        %v627 = vpack.c.bf16 %v619, %v618
        %v628 = vld [vmem:[#allocation7] sm:$0xf]
        %v629 = vld [vmem:[#allocation7 + $0x4] sm:$0xf]
        %v630 = vld [vmem:[#allocation7 + $0x8] sm:$0xf]
        %v631 = vld [vmem:[#allocation7 + $0xc] sm:$0xf]
        %v632 = vld [vmem:[#allocation7 + $0x10] sm:$0xf]
        %v633 = vld [vmem:[#allocation7 + $0x14] sm:$0xf]
        %v634 = vld [vmem:[#allocation7 + $0x18] sm:$0xf]
        %v635 = vld [vmem:[#allocation7 + $0x1c] sm:$0xf]
        %v636 = vld [vmem:[#allocation7 + $0x20] sm:$0xf]
        %v637 = vld [vmem:[#allocation7 + $0x24] sm:$0xf]
        %v638 = vld [vmem:[#allocation7 + $0x28] sm:$0xf]
        %v639 = vld [vmem:[#allocation7 + $0x2c] sm:$0xf]
        %v640 = vld [vmem:[#allocation7 + $0x30] sm:$0xf]
        %v641 = vld [vmem:[#allocation7 + $0x34] sm:$0xf]
        %v642 = vld [vmem:[#allocation7 + $0x38] sm:$0xf]
        %v643 = vld [vmem:[#allocation7 + $0x3c] sm:$0xf]
        %v644 = vld [vmem:[%s4] sm:$0x1]
        %v646 = vlaneseq
        %v647 = vshrl.u32 %v646, 7
        %v648 = vsub.s32 0, %v647
        %v649 = vrot.slane %v644, %v648
        %v667 = vunpack.c.l.b16 %v628
        %v668 = vunpack.c.l.b16 %v629
        %v669 = vunpack.c.l.b16 %v630
        %v670 = vunpack.c.l.b16 %v631
        %v671 = vunpack.c.l.b16 %v632
        %v672 = vunpack.c.l.b16 %v633
        %v673 = vunpack.c.l.b16 %v634
        %v674 = vunpack.c.l.b16 %v635
        %v675 = vunpack.c.l.b16 %v636
        %v676 = vunpack.c.l.b16 %v637
        %v677 = vunpack.c.l.b16 %v638
        %v678 = vunpack.c.l.b16 %v639
        %v679 = vunpack.c.l.b16 %v640
        %v680 = vunpack.c.l.b16 %v641
        %v681 = vunpack.c.l.b16 %v642
        %v682 = vunpack.c.l.b16 %v643
        %v683 = vpack.c.b16 %v668, %v667
        %v684 = vpack.c.b16 %v670, %v669
        %v685 = vpack.c.b16 %v672, %v671
        %v686 = vpack.c.b16 %v674, %v673
        %v687 = vpack.c.b16 %v676, %v675
        %v688 = vpack.c.b16 %v678, %v677
        %v689 = vpack.c.b16 %v680, %v679
        %v690 = vpack.c.b16 %v682, %v681
        %699 = vmatprep.subr.bf16.mxu0 0
        %700 = vmatpush1.bf16.msra.mxu0 %v683
        %701 = vmatprep.subr.bf16.mxu0 0
        %702 = vmatpush1.bf16.msra.mxu0 %v684
        %703 = vmatprep.subr.bf16.mxu0 0
        %704 = vmatpush1.bf16.msra.mxu0 %v685
        %705 = vmatprep.subr.bf16.mxu0 0
        %706 = vmatpush1.bf16.msra.mxu0 %v686
        %707 = vmatprep.subr.bf16.mxu0 0
        %708 = vmatpush1.bf16.msra.mxu0 %v687
        %709 = vmatprep.subr.bf16.mxu0 0
        %710 = vmatpush1.bf16.msra.mxu0 %v688
        %711 = vmatprep.subr.bf16.mxu0 0
        %712 = vmatpush1.bf16.msra.mxu0 %v689
        %713 = vmatprep.subr.bf16.mxu0 0
        %714 = vmatpush1.bf16.msra.mxu0 %v690
        %715 = vmatprep.subr.bf16.mxu0 0
        %716 = vmatpush1.bf16.msra.mxu0 0
        %717 = vmatprep.subr.bf16.mxu0 0
        %718 = vmatpush1.bf16.msra.mxu0 0
        %719 = vmatprep.subr.bf16.mxu0 0
        %720 = vmatpush1.bf16.msra.mxu0 0
        %721 = vmatprep.subr.bf16.mxu0 0
        %722 = vmatpush1.bf16.msra.mxu0 0
        %723 = vmatprep.subr.bf16.mxu0 0
        %724 = vmatpush1.bf16.msra.mxu0 0
        %725 = vmatprep.subr.bf16.mxu0 0
        %726 = vmatpush1.bf16.msra.mxu0 0
        %727 = vmatprep.subr.bf16.mxu0 0
        %728 = vmatpush1.bf16.msra.mxu0 0
        %729 = vmatprep.subr.bf16.mxu0 0
        %730 = vmatpush1.bf16.msra.mxu0 0
        %731 = vmatprep.mubr.bf16.mxu0 0
        %732 = vmatmul.mubr.bf16.gmra.mrb[0].mxu0 %v620
        %v733 = vpop.f32.mrb[0].mxu0
        %v734 = vadd.f32 %v649, %v733
        %v735 = vpop.f32.mrb[0].mxu0
        %v736 = vpop.f32.mrb[0].mxu0
        %v737 = vadd.f32 %v649, %v736
        %v738 = vpop.f32.mrb[0].mxu0
        %739 = vmatprep.mubr.bf16.mxu0 0
        %740 = vmatmul.mubr.bf16.gmra.mrb[0].mxu0 %v621
        %v741 = vpop.f32.mrb[0].mxu0
        %v742 = vadd.f32 %v649, %v741
        %v743 = vpop.f32.mrb[0].mxu0
        %v744 = vpop.f32.mrb[0].mxu0
        %v745 = vadd.f32 %v649, %v744
        %v746 = vpop.f32.mrb[0].mxu0
        %747 = vmatprep.mubr.bf16.mxu0 0
        %748 = vmatmul.mubr.bf16.gmra.mrb[0].mxu0 %v622
        %v749 = vpop.f32.mrb[0].mxu0
        %v750 = vadd.f32 %v649, %v749
        %v751 = vpop.f32.mrb[0].mxu0
        %v752 = vpop.f32.mrb[0].mxu0
        %v753 = vadd.f32 %v649, %v752
        %v754 = vpop.f32.mrb[0].mxu0
        %755 = vmatprep.mubr.bf16.mxu0 0
        %756 = vmatmul.mubr.bf16.gmra.mrb[0].mxu0 %v623
        %v757 = vpop.f32.mrb[0].mxu0
        %v758 = vadd.f32 %v649, %v757
        %v759 = vpop.f32.mrb[0].mxu0
        %v760 = vpop.f32.mrb[0].mxu0
        %v761 = vadd.f32 %v649, %v760
        %v762 = vpop.f32.mrb[0].mxu0
        %763 = vmatprep.mubr.bf16.mxu0 0
        %764 = vmatmul.mubr.bf16.gmra.mrb[0].mxu0 %v624
        %v765 = vpop.f32.mrb[0].mxu0
        %v766 = vadd.f32 %v649, %v765
        %v767 = vpop.f32.mrb[0].mxu0
        %v768 = vpop.f32.mrb[0].mxu0
        %v769 = vadd.f32 %v649, %v768
        %v770 = vpop.f32.mrb[0].mxu0
        %771 = vmatprep.mubr.bf16.mxu0 0
        %772 = vmatmul.mubr.bf16.gmra.mrb[0].mxu0 %v625
        %v773 = vpop.f32.mrb[0].mxu0
        %v774 = vadd.f32 %v649, %v773
        %v775 = vpop.f32.mrb[0].mxu0
        %v776 = vpop.f32.mrb[0].mxu0
        %v777 = vadd.f32 %v649, %v776
        %v778 = vpop.f32.mrb[0].mxu0
        %779 = vmatprep.mubr.bf16.mxu0 0
        %780 = vmatmul.mubr.bf16.gmra.mrb[0].mxu0 %v626
        %v781 = vpop.f32.mrb[0].mxu0
        %v782 = vadd.f32 %v649, %v781
        %v783 = vpop.f32.mrb[0].mxu0
        %v784 = vpop.f32.mrb[0].mxu0
        %v785 = vadd.f32 %v649, %v784
        %v786 = vpop.f32.mrb[0].mxu0
        %787 = vmatprep.mubr.bf16.mxu0 0
        %788 = vmatmul.mubr.bf16.gmra.mrb[0].mxu0 %v627
        %v789 = vpop.f32.mrb[0].mxu0
        %v790 = vadd.f32 %v649, %v789
        %v791 = vpop.f32.mrb[0].mxu0
        %v792 = vpop.f32.mrb[0].mxu0
        %v793 = vadd.f32 %v649, %v792
        %v794 = vpop.f32.mrb[0].mxu0
        %795 = vdwg.mxu0
        %v796 = vlaneseq
        %v797 = vand.u32 %v796, 127
        %vm798 = vcmp.lt.s32.totalorder %v797, 8
        %v799 = vsel %vm798, %v734, -inf
        %v800 = vsel %vm798, %v737, -inf
        %v801 = vsel %vm798, %v742, -inf
        %v802 = vsel %vm798, %v745, -inf
        %v803 = vsel %vm798, %v750, -inf
        %v804 = vsel %vm798, %v753, -inf
        %v805 = vsel %vm798, %v758, -inf
        %v806 = vsel %vm798, %v761, -inf
        %v807 = vsel %vm798, %v766, -inf
        %v808 = vsel %vm798, %v769, -inf
        %v809 = vsel %vm798, %v774, -inf
        %v810 = vsel %vm798, %v777, -inf
        %v811 = vsel %vm798, %v782, -inf
        %v812 = vsel %vm798, %v785, -inf
        %v813 = vsel %vm798, %v790, -inf
        %v814 = vsel %vm798, %v793, -inf
        %815 = vmax.xlane.f32.xlu0 %v799
        %v816 = vpop.xlane.xlu0 %815
        %817 = vmax.xlane.f32.xlu0 %v800
        %v818 = vpop.xlane.xlu0 %817
        %819 = vmax.xlane.f32.xlu0 %v801
        %v820 = vpop.xlane.xlu0 %819
        %821 = vmax.xlane.f32.xlu0 %v802
        %v822 = vpop.xlane.xlu0 %821
        %823 = vmax.xlane.f32.xlu0 %v803
        %v824 = vpop.xlane.xlu0 %823
        %825 = vmax.xlane.f32.xlu0 %v804
        %v826 = vpop.xlane.xlu0 %825
        %827 = vmax.xlane.f32.xlu0 %v805
        %v828 = vpop.xlane.xlu0 %827
        %829 = vmax.xlane.f32.xlu0 %v806
        %v830 = vpop.xlane.xlu0 %829
        %831 = vmax.xlane.f32.xlu0 %v807
        %v832 = vpop.xlane.xlu0 %831
        %833 = vmax.xlane.f32.xlu0 %v808
        %v834 = vpop.xlane.xlu0 %833
        %835 = vmax.xlane.f32.xlu0 %v809
        %v836 = vpop.xlane.xlu0 %835
        %837 = vmax.xlane.f32.xlu0 %v810
        %v838 = vpop.xlane.xlu0 %837
        %839 = vmax.xlane.f32.xlu0 %v811
        %v840 = vpop.xlane.xlu0 %839
        %841 = vmax.xlane.f32.xlu0 %v812
        %v842 = vpop.xlane.xlu0 %841
        %843 = vmax.xlane.f32.xlu0 %v813
        %v844 = vpop.xlane.xlu0 %843
        %845 = vmax.xlane.f32.xlu0 %v814
        %v846 = vpop.xlane.xlu0 %845
        %v847 = vsub.f32 %v799, %v816
        %v848 = vsub.f32 %v800, %v818
        %v849 = vsub.f32 %v801, %v820
        %v850 = vsub.f32 %v802, %v822
        %v851 = vsub.f32 %v803, %v824
        %v852 = vsub.f32 %v804, %v826
        %v853 = vsub.f32 %v805, %v828
        %v854 = vsub.f32 %v806, %v830
        %v855 = vsub.f32 %v807, %v832
        %v856 = vsub.f32 %v808, %v834
        %v857 = vsub.f32 %v809, %v836
        %v858 = vsub.f32 %v810, %v838
        %v859 = vsub.f32 %v811, %v840
        %v860 = vsub.f32 %v812, %v842
        %v861 = vsub.f32 %v813, %v844
        %v862 = vsub.f32 %v814, %v846
        %v863 = vmul.f32 %v847, 1.442695
        %v864 = vpow.pop %v863
        %v865 = vmul.f32 %v848, 1.442695
        %v866 = vpow.pop %v865
        %v867 = vmul.f32 %v849, 1.442695
        %v868 = vpow.pop %v867
        %v869 = vmul.f32 %v850, 1.442695
        %v870 = vpow.pop %v869
        %v871 = vmul.f32 %v851, 1.442695
        %v872 = vpow.pop %v871
        %v873 = vmul.f32 %v852, 1.442695
        %v874 = vpow.pop %v873
        %v875 = vmul.f32 %v853, 1.442695
        %v876 = vpow.pop %v875
        %v877 = vmul.f32 %v854, 1.442695
        %v878 = vpow.pop %v877
        %v879 = vmul.f32 %v855, 1.442695
        %v880 = vpow.pop %v879
        %v881 = vmul.f32 %v856, 1.442695
        %v882 = vpow.pop %v881
        %v883 = vmul.f32 %v857, 1.442695
        %v884 = vpow.pop %v883
        %v885 = vmul.f32 %v858, 1.442695
        %v886 = vpow.pop %v885
        %v887 = vmul.f32 %v859, 1.442695
        %v888 = vpow.pop %v887
        %v889 = vmul.f32 %v860, 1.442695
        %v890 = vpow.pop %v889
        %v891 = vmul.f32 %v861, 1.442695
        %v892 = vpow.pop %v891
        %v893 = vmul.f32 %v862, 1.442695
        %v894 = vpow.pop %v893
        %v895 = vsel %vm798, %v864, 0.0
        %v896 = vsel %vm798, %v866, 0.0
        %v897 = vsel %vm798, %v868, 0.0
        %v898 = vsel %vm798, %v870, 0.0
        %v899 = vsel %vm798, %v872, 0.0
        %v900 = vsel %vm798, %v874, 0.0
        %v901 = vsel %vm798, %v876, 0.0
        %v902 = vsel %vm798, %v878, 0.0
        %v903 = vsel %vm798, %v880, 0.0
        %v904 = vsel %vm798, %v882, 0.0
        %v905 = vsel %vm798, %v884, 0.0
        %v906 = vsel %vm798, %v886, 0.0
        %v907 = vsel %vm798, %v888, 0.0
        %v908 = vsel %vm798, %v890, 0.0
        %v909 = vsel %vm798, %v892, 0.0
        %v910 = vsel %vm798, %v894, 0.0
        %911 = vadd.xlane.f32.xlu0 %v895
        %v912 = vpop.xlane.xlu0 %911
        %913 = vadd.xlane.f32.xlu0 %v896
        %v914 = vpop.xlane.xlu0 %913
        %915 = vadd.xlane.f32.xlu0 %v897
        %v916 = vpop.xlane.xlu0 %915
        %917 = vadd.xlane.f32.xlu0 %v898
        %v918 = vpop.xlane.xlu0 %917
        %919 = vadd.xlane.f32.xlu0 %v899
        %v920 = vpop.xlane.xlu0 %919
        %921 = vadd.xlane.f32.xlu0 %v900
        %v922 = vpop.xlane.xlu0 %921
        %923 = vadd.xlane.f32.xlu0 %v901
        %v924 = vpop.xlane.xlu0 %923
        %925 = vadd.xlane.f32.xlu0 %v902
        %v926 = vpop.xlane.xlu0 %925
        %927 = vadd.xlane.f32.xlu0 %v903
        %v928 = vpop.xlane.xlu0 %927
        %929 = vadd.xlane.f32.xlu0 %v904
        %v930 = vpop.xlane.xlu0 %929
        %931 = vadd.xlane.f32.xlu0 %v905
        %v932 = vpop.xlane.xlu0 %931
        %933 = vadd.xlane.f32.xlu0 %v906
        %v934 = vpop.xlane.xlu0 %933
        %935 = vadd.xlane.f32.xlu0 %v907
        %v936 = vpop.xlane.xlu0 %935
        %937 = vadd.xlane.f32.xlu0 %v908
        %v938 = vpop.xlane.xlu0 %937
        %939 = vadd.xlane.f32.xlu0 %v909
        %v940 = vpop.xlane.xlu0 %939
        %941 = vadd.xlane.f32.xlu0 %v910
        %v942 = vpop.xlane.xlu0 %941
        %v943 = vrcp.pop %v912
        %v944 = vrcp.pop %v914
        %v945 = vrcp.pop %v916
        %v946 = vrcp.pop %v918
        %v947 = vrcp.pop %v920
        %v948 = vrcp.pop %v922
        %v949 = vrcp.pop %v924
        %v950 = vrcp.pop %v926
        %v951 = vrcp.pop %v928
        %v952 = vrcp.pop %v930
        %v953 = vrcp.pop %v932
        %v954 = vrcp.pop %v934
        %v955 = vrcp.pop %v936
        %v956 = vrcp.pop %v938
        %v957 = vrcp.pop %v940
        %v958 = vrcp.pop %v942
        %v959 = vmul.f32 %v895, %v943
        %v960 = vmul.f32 %v896, %v944
        %v961 = vmul.f32 %v897, %v945
        %v962 = vmul.f32 %v898, %v946
        %v963 = vmul.f32 %v899, %v947
        %v964 = vmul.f32 %v900, %v948
        %v965 = vmul.f32 %v901, %v949
        %v966 = vmul.f32 %v902, %v950
        %v967 = vmul.f32 %v903, %v951
        %v968 = vmul.f32 %v904, %v952
        %v969 = vmul.f32 %v905, %v953
        %v970 = vmul.f32 %v906, %v954
        %v971 = vmul.f32 %v907, %v955
        %v972 = vmul.f32 %v908, %v956
        %v973 = vmul.f32 %v909, %v957
        %v974 = vmul.f32 %v910, %v958
        %v975 = vsel %vm798, %v959, %v734
        %v976 = vsel %vm798, %v960, %v737
        %v977 = vsel %vm798, %v961, %v742
        %v978 = vsel %vm798, %v962, %v745
        %v979 = vsel %vm798, %v963, %v750
        %v980 = vsel %vm798, %v964, %v753
        %v981 = vsel %vm798, %v965, %v758
        %v982 = vsel %vm798, %v966, %v761
        %v983 = vsel %vm798, %v967, %v766
        %v984 = vsel %vm798, %v968, %v769
        %v985 = vsel %vm798, %v969, %v774
        %v986 = vsel %vm798, %v970, %v777
        %v987 = vsel %vm798, %v971, %v782
        %v988 = vsel %vm798, %v972, %v785
        %v989 = vsel %vm798, %v973, %v790
        %v990 = vsel %vm798, %v974, %v793
        %991 = vst [vmem:[%s272] sm:$0xff] %v975
        %992 = vst [vmem:[%s272 + $0x8] sm:$0xff] %v976
        %993 = vst [vmem:[%s272 + $0x10] sm:$0xff] %v977
        %994 = vst [vmem:[%s272 + $0x18] sm:$0xff] %v978
        %995 = vst [vmem:[%s272 + $0x20] sm:$0xff] %v979
        %996 = vst [vmem:[%s272 + $0x28] sm:$0xff] %v980
        %997 = vst [vmem:[%s272 + $0x30] sm:$0xff] %v981
        %998 = vst [vmem:[%s272 + $0x38] sm:$0xff] %v982
        %999 = vst [vmem:[%s272 + $0x40] sm:$0xff] %v983
        %1000 = vst [vmem:[%s272 + $0x48] sm:$0xff] %v984
        %1001 = vst [vmem:[%s272 + $0x50] sm:$0xff] %v985
        %1002 = vst [vmem:[%s272 + $0x58] sm:$0xff] %v986
        %1003 = vst [vmem:[%s272 + $0x60] sm:$0xff] %v987
        %1004 = vst [vmem:[%s272 + $0x68] sm:$0xff] %v988
        %1005 = vst [vmem:[%s272 + $0x70] sm:$0xff] %v989
        %1006 = vst [vmem:[%s272 + $0x78] sm:$0xff] %v990
        %s1007 = sand.u32 %s141, 1
        %s1008 = scalar_lea.sflag [#allocation4], %s1007
        %s1009 = sand.u32 %s141, 1
        %s1010 = smul.addr %s1009, 128
        %s1011 = scalar_lea.vmem [#allocation8], %s1010
        // Predicated region
        $region53: #{tpu_custom_call.1} parent=39 // pred_check
          %p1012 = pneg %p151
        $region54: #{tpu_custom_call.1} parent=39 // pred_check_branch
          %1014 = sbr.rel (%p1012) target = $region56
        $region55: #{tpu_custom_call.1} parent=39 // pred_region
          %s1015 = smul.u32 16, %s23
          %s1017 = ssub.s32 2048, 2048
          %1018 = vsyncadd %s1008, %s1017
          %s1019 = smul.addr %s1015, 128
          %s1020 = scalar_lea.hbm %s5, %s1019
          %s1021 = sshll.u32 %s1011, 4
          %s1022 = int_to_ptr.vmem [resolvable:$true] %s1021
          %1027 = dma.vmem_to_hbm [thread:$0]  %s1022, 2048, %s1020, %s1008, 128, 128, 8
        $region56: #{tpu_custom_call.1} parent=39 // pred_fallthru
          _
      $region40: #{tpu_custom_call.1} parent=5 // pred_fallthru
        _
      %p1028 = scmp.le.s32.totalorder 2, %s18
      // Predicated region
      $region57: #{tpu_custom_call.1} parent=5 // pred_check
        %p1029 = pneg %p1028
      $region58: #{tpu_custom_call.1} parent=5 // pred_check_branch
        %1031 = sbr.rel (%p1029) target = $region60
      $region59: #{tpu_custom_call.1} parent=5 // pred_region
        %s1032 = ssub.s32 %s18, 2
        // Predicated region
        $region61: #{tpu_custom_call.1} parent=59 // pred_check
          %p1033 = pneg %p157
        $region62: #{tpu_custom_call.1} parent=59 // pred_check_branch
          %1035 = sbr.rel (%p1033) target = $region64
        $region63: #{tpu_custom_call.1} parent=59 // pred_region
          %s1036 = sand.u32 %s142, 1
          %s1037 = scalar_lea.sflag [#allocation4], %s1036
          %s1038 = sand.u32 %s142, 1
          %s1039 = smul.addr %s1038, 128
          %s1040 = scalar_lea.vmem [#allocation8], %s1039
          %1041 = dma.done %s1037, 2048
        $region64: #{tpu_custom_call.1} parent=59 // pred_fallthru
          _
      $region60: #{tpu_custom_call.1} parent=5 // pred_fallthru
        _
    $region6: #{tpu_custom_call.1} parent=1 // loop_footer
      %s22 = sadd.s32 1, %s18
    $region7: #{tpu_custom_call.1} parent=1 // loop_footer_branch
      %17 = sbr.rel target = $region3
    $region8: #{tpu_custom_call.1} parent=1 // loop_exit
      _
    %1042 = vsyncpa [#allocation3], 1
    %s1043 = scalar_lea.sflag [#allocation3], 1
    %1044 = vsyncpa %s1043, 1
    %1045 = vsyncpa [#allocation6], 1
    %1046 = vsyncpa [#allocation4], 1
    %s1047 = scalar_lea.sflag [#allocation4], 1
    %1048 = vsyncpa %s1047, 1

</llo_original>
